<compile_context>
chip_gen: v7x
topology: tpu7x:2x2x1
jax: 0.10.0
libtpu: 0.0.40
codegen_flags: <defaults>
</compile_context>

<pallas_src>
import jax
import jax.numpy as jnp
from jax.experimental import pallas as pl
from jax.experimental.pallas import tpu as pltpu


def _round_up(a: int, b: int) -> int:
    return (a + b - 1) // b * b


def partially_connected_kernel(x_ref, w_ref, m_ref, b_ref, o_ref):
    """One (batch-tile, output-tile) block of out = (x * w) @ blockdiag_mask + bias.

    x_ref: (TB, KB)  f32  batch tile x feature slab for this output tile
    w_ref: (1, KB)   f32  per-input weights slab (VPU broadcast multiply)
    m_ref: (KB, TN)  f32  shared 0/1 block-diagonal mask tile (VMEM resident)
    b_ref: (1, TN)   f32  bias tile
    o_ref: (TB, TN)  f32  output tile
    """
    xw = x_ref[...] * w_ref[...]
    # TODO(synk): on v5e cast xw and the (lossless 0/1) mask to bf16 here for full
    # MXU rate; kept f32 to preserve the 1e-5 tolerance of the self-test.
    o_ref[...] = (
        jnp.dot(xw, m_ref[...], preferred_element_type=jnp.float32) + b_ref[...]
    ).astype(o_ref.dtype)


def _tpu_params():
    """(target output-tile width, physical VMEM bytes) with safe fallbacks."""
    tn_target, vmem_phys = 256, 64 << 20          # conservative default (v7x VMEM)
    try:
        kind = jax.devices()[0].device_kind.lower()
        if "v5" in kind:
            tn_target, vmem_phys = 128, 128 << 20  # 128x128 MXU on v5e
        elif "v6" in kind:
            tn_target, vmem_phys = 256, 128 << 20
        elif "v7" in kind:
            tn_target, vmem_phys = 256, 64 << 20
    except Exception:
        pass
    try:
        info = pltpu.get_tpu_info()
        vmem_phys = int(getattr(info, "vmem_capacity_bytes", vmem_phys))
    except Exception:
        pass
    return tn_target, vmem_phys


def partially_connected(x, weights, bias, *, block_batch=1024):
    """x: (B, H1) f32, weights: (H1,) f32, bias: (H2,) f32 -> (B, H2) f32."""
    B, H1 = x.shape
    H2 = bias.shape[0]
    assert H1 % H2 == 0, "hidden_features1 must be divisible by hidden_features2"
    colsize = H1 // H2

    tn_target, vmem_phys = _tpu_params()

    # ---- output tile TN and (possibly padded) output width H2p -----------------
    if H2 <= tn_target:
        TN, H2p = H2, H2             # single full-dim tile: no lane padding at all
    else:
        TN = 0
        for cand in range(tn_target, 0, -128):
            if H2 % cand == 0:
                TN, H2p = cand, H2
                break
        if TN == 0:
            # TODO(synk): ragged H2 forces a wrapper pad of x's feature dim (extra
            # HBM pass); keep H2 a multiple of 128 at production sizes.
            TN = 128
            H2p = _round_up(H2, 128)
    H1p = H2p * colsize
    n_j = H2p // TN
    KB = TN * colsize                # per-output-tile feature width

    x32 = x.astype(jnp.float32)
    w_row = weights.astype(jnp.float32).reshape(1, H1)
    b_row = bias.astype(jnp.float32).reshape(1, H2)
    if H2p != H2:                    # rare ragged fallback only
        x32 = jnp.pad(x32, ((0, 0), (0, H1p - H1)))
        w_row = jnp.pad(w_row, ((0, 0), (0, H1p - H1)))
        b_row = jnp.pad(b_row, ((0, 0), (0, H2p - H2)))

    # ---- single reusable block-diagonal mask tile: identical for every j -------
    row = jnp.arange(KB, dtype=jnp.int32)[:, None]
    col = jnp.arange(TN, dtype=jnp.int32)[None, :]
    lo = col * colsize
    mask = ((row >= lo) & (row < lo + colsize)).astype(jnp.float32)

    # ---- batch tile: fill ~3/8 of physical VMEM, keep >=4 tiles for megacore ----
    target_ws = min(vmem_phys * 3 // 8, 48 << 20)
    resident = 4 * (KB * TN + 2 * (KB + TN))          # mask + small double-buffers
    per_row = 4 * (KB + TN)                           # x slab + out slab per row
    avail = max(target_ws - resident, 1 << 20)
    tb_cap = max(8, (avail // (2 * per_row)) // 8 * 8)
    if B < 8:
        TB = B                                        # full-dim block (< 8 sublanes)
    else:
        TB = min(block_batch, tb_cap)
        TB = min(TB, max(8, _round_up(pl.cdiv(B, 4), 8)))
        TB = max(8, TB // 8 * 8)
    n_b = pl.cdiv(B, TB)      # ragged last batch tile handled by Pallas, no wrapper pad

    ws = 4 * (2 * TB * KB + 2 * TB * TN + KB * TN + 2 * (KB + TN))
    vmem_limit = int(min(max(2 * ws, 16 << 20), max(vmem_phys - (16 << 20), 16 << 20)))

    cost = pl.CostEstimate(
        flops=2 * B * H1p * TN,                                        # actual MXU work
        transcendentals=0,
        bytes_accessed=4 * (B * H1p + B * H2p + KB * TN + H1p + H2p),  # HBM traffic
    )

    out = pl.pallas_call(
        partially_connected_kernel,
        out_shape=jax.ShapeDtypeStruct((B, H2p), jnp.float32),
        grid_spec=pltpu.PrefetchScalarGridSpec(
            num_scalar_prefetch=0,
            grid=(n_b, n_j),
            in_specs=[
                pl.BlockSpec((TB, KB), lambda b, j: (b, j)),   # x: batch x feature slab
                pl.BlockSpec((1, KB), lambda b, j: (0, j)),    # weights slab for tile j
                pl.BlockSpec((KB, TN), lambda b, j: (0, 0)),   # shared mask (resident)
                pl.BlockSpec((1, TN), lambda b, j: (0, j)),    # bias tile
            ],
            out_specs=pl.BlockSpec((TB, TN), lambda b, j: (b, j)),
        ),
        compiler_params=pltpu.CompilerParams(
            dimension_semantics=("parallel", "parallel"),
            vmem_limit_bytes=vmem_limit,
        ),
        cost_estimate=cost,
    )(x32, w_row, mask, b_row)

    return out[:, :H2] if H2p != H2 else out


def reference(x, weights, bias):
    H1 = weights.shape[0]
    H2 = bias.shape[0]
    colsize = H1 // H2
    row = jnp.arange(H1)[:, None]
    col = jnp.arange(H2)[None, :]
    mask = ((row >= col * colsize) & (row < (col + 1) * colsize)).astype(jnp.float32)
    return x @ (weights[:, None] * mask) + bias


if __name__ == "__main__":
    # Module config: hidden_features1=32, hidden_features2=8 -> colsize=4
    hidden_features1 = 32
    hidden_features2 = 8
    batch = 8

    key = jax.random.PRNGKey(0)
    kx, kw, kb = jax.random.split(key, 3)

    x = jax.random.normal(kx, (batch, hidden_features1), dtype=jnp.float32)
    weights = jax.random.normal(kw, (hidden_features1,), dtype=jnp.float32)
    bias = jax.random.normal(kb, (hidden_features2,), dtype=jnp.float32)

    out = partially_connected(x, weights, bias)
    out = jax.block_until_ready(out)

    ref = reference(x, weights, bias)
    assert out.shape == (batch, hidden_features2)
    assert jnp.allclose(out, ref, atol=1e-5, rtol=1e-5), "mismatch vs reference"

    print("KERNEL_OK")
</pallas_src>

<mosaic_0001>
module attributes {stable_mosaic.version = 11 : i64} {
  func.func @partially_connected_kernel(%arg0: i32, %arg1: i32, %arg2: memref<8x32xf32, #tpu.memory_space<vmem>>, %arg3: memref<1x32xf32, #tpu.memory_space<vmem>>, %arg4: memref<32x8xf32, #tpu.memory_space<vmem>>, %arg5: memref<1x8xf32, #tpu.memory_space<vmem>>, %arg6: memref<8x8xf32, #tpu.memory_space<vmem>>) attributes {dimension_semantics = [#tpu.dimension_semantics<parallel>, #tpu.dimension_semantics<parallel>], iteration_bounds = array<i64: 1, 1>, scalar_prefetch = 0 : i64, scratch_operands = 0 : i64, tpu.core_type = #tpu.core_type<tc>, window_params = [{transform_indices = @transform_0, window_bounds = array<i64: 8, 32>}, {transform_indices = @transform_1, window_bounds = array<i64: 1, 32>}, {pipeline_mode = #tpu.pipeline_mode<synchronous>, transform_indices = @transform_2, window_bounds = array<i64: 32, 8>}, {transform_indices = @transform_3, window_bounds = array<i64: 1, 8>}, {transform_indices = @transform_4, window_bounds = array<i64: 8, 8>}]} {
    %c0 = arith.constant 0 : index
    %c0_0 = arith.constant 0 : index
    %0 = vector.load %arg2[%c0, %c0_0] : memref<8x32xf32, #tpu.memory_space<vmem>>, vector<8x32xf32>
    %c0_1 = arith.constant 0 : index
    %c0_2 = arith.constant 0 : index
    %1 = vector.load %arg3[%c0_1, %c0_2] : memref<1x32xf32, #tpu.memory_space<vmem>>, vector<1x32xf32>
    %2 = vector.broadcast %1 : vector<1x32xf32> to vector<8x32xf32>
    %3 = arith.mulf %0, %2 : vector<8x32xf32>
    %c0_3 = arith.constant 0 : index
    %c0_4 = arith.constant 0 : index
    %4 = vector.load %arg4[%c0_3, %c0_4] : memref<32x8xf32, #tpu.memory_space<vmem>>, vector<32x8xf32>
    %cst = arith.constant dense<0.000000e+00> : vector<8x8xf32>
    %5 = tpu.matmul %3, %4, %cst {dimension_numbers = #tpu.dot_dimension_numbers<[1], [0], [0], [1], [0, 0, 1, 1], [], []>} : vector<8x32xf32>, vector<32x8xf32>, vector<8x8xf32> -> vector<8x8xf32>
    %c0_5 = arith.constant 0 : index
    %c0_6 = arith.constant 0 : index
    %6 = vector.load %arg5[%c0_5, %c0_6] : memref<1x8xf32, #tpu.memory_space<vmem>>, vector<1x8xf32>
    %7 = vector.broadcast %6 : vector<1x8xf32> to vector<8x8xf32>
    %8 = arith.addf %5, %7 : vector<8x8xf32>
    %c0_7 = arith.constant 0 : index
    %c0_8 = arith.constant 0 : index
    %9 = vector.load %arg6[%c0_7, %c0_8] : memref<8x8xf32, #tpu.memory_space<vmem>>, vector<8x8xf32>
    tpu.vector_store %arg6[%c0_7, %c0_8], %8 {strides = array<i32>} : memref<8x8xf32, #tpu.memory_space<vmem>>, vector<8x8xf32>,
    return
  }
  func.func @transform_0(%arg0: i32, %arg1: i32) -> (i32, i32) {
    %c0_i32 = arith.constant 0 : i32
    return %arg0, %arg1 : i32, i32
  }
  func.func @transform_1(%arg0: i32, %arg1: i32) -> (i32, i32) {
    %c0_i32 = arith.constant 0 : i32
    %c0_i32_0 = arith.constant 0 : i32
    return %c0_i32, %arg1 : i32, i32
  }
  func.func @transform_2(%arg0: i32, %arg1: i32) -> (i32, i32) {
    %c0_i32 = arith.constant 0 : i32
    %c0_i32_0 = arith.constant 0 : i32
    %c0_i32_1 = arith.constant 0 : i32
    return %c0_i32, %c0_i32_0 : i32, i32
  }
  func.func @transform_3(%arg0: i32, %arg1: i32) -> (i32, i32) {
    %c0_i32 = arith.constant 0 : i32
    %c0_i32_0 = arith.constant 0 : i32
    return %c0_i32, %arg1 : i32, i32
  }
  func.func @transform_4(%arg0: i32, %arg1: i32) -> (i32, i32) {
    %c0_i32 = arith.constant 0 : i32
    return %arg0, %arg1 : i32, i32
  }
}

</mosaic_0001>

<llo_original>
// kernel: tpu_custom_call.1
$region0: #{tpu_custom_call.1}
  #allocation0 [shape = 'u32[]', space=smem, size = 0x4, offset = 0x4, fixed_abs, tag = 'smem constant byte address 0x4 - core index']
  #allocation1 [shape = 'u32[144,128]{1,0:T(1,128)}', space=vmem, size = 0x12000, scoped, tag = 'internal scratch']
  %s0 = inlined_call_operand.vmem [shape: f32[8,32], index: 0, kind: input, shape index: {}]
  %s1 = inlined_call_operand.vmem [shape: f32[1,32], index: 1, kind: input, shape index: {}]
  %s2 = inlined_call_operand.vmem [shape: f32[32,8], index: 2, kind: input, shape index: {}]
  %s3 = inlined_call_operand.vmem [shape: f32[1,8], index: 3, kind: input, shape index: {}]
  %s4 = inlined_call_operand.hbm [shape: f32[8,8], index: 4, kind: output, shape index: {}]
  %s5 = sld [smem:[#allocation0]]
  $region26: #{tpu_custom_call.1} parent=0
    _
  %s7 = ssub.s32 1, %s5
  %s8 = scalar_select 0, %s7, %s5
  $region1: #{tpu_custom_call.1} parent=0
    #allocation2 [shape = 'u8[4096]{0}', space=vmem, size = 0x1000, scoped, tag = 'output window, operand 0, single buffered']
    #allocation3 [shape = 's32[1]{0}', space=sflag, size = 0x4, scoped, tag = 'scoped memory for tpu_custom_call.1']
    %9 = vsyncpa [#allocation3], 0
    // Predicated region
    $region2: #{tpu_custom_call.1} parent=1 // pred_check
      _
    $region3: #{tpu_custom_call.1} parent=1 // pred_check_branch
      %11 = sbr.rel (0) target = $region5
    $region4: #{tpu_custom_call.1} parent=1 // pred_region
      _
    $region5: #{tpu_custom_call.1} parent=1 // pred_fallthru
      _
    // Predicated region
    $region6: #{tpu_custom_call.1} parent=1 // pred_check
      _
    $region7: #{tpu_custom_call.1} parent=1 // pred_check_branch
      %13 = sbr.rel (0) target = $region9
    $region8: #{tpu_custom_call.1} parent=1 // pred_region
      _
    $region9: #{tpu_custom_call.1} parent=1 // pred_fallthru
      _
    // Predicated region
    $region10: #{tpu_custom_call.1} parent=1 // pred_check
      _
    $region11: #{tpu_custom_call.1} parent=1 // pred_check_branch
      %15 = sbr.rel (0) target = $region13
    $region12: #{tpu_custom_call.1} parent=1 // pred_region
      _
    $region13: #{tpu_custom_call.1} parent=1 // pred_fallthru
      _
    // Predicated region
    $region14: #{tpu_custom_call.1} parent=1 // pred_check
      _
    $region15: #{tpu_custom_call.1} parent=1 // pred_check_branch
      %17 = sbr.rel (0) target = $region17
    $region16: #{tpu_custom_call.1} parent=1 // pred_region
      _
    $region17: #{tpu_custom_call.1} parent=1 // pred_fallthru
      _
    %v18 = vld [vmem:[%s0] sm:$0xff]
    %v19 = vld [vmem:[%s1] sm:$0x1]
    %v21 = vlaneseq
    %v22 = vshrl.u32 %v21, 7
    %v23 = vsub.s32 0, %v22
    %v24 = vrot.slane %v19, %v23
    %v26 = vmul.f32 %v18, %v24
    %v27 = vld [vmem:[%s2] sm:$0xff]
    %v28 = vld [vmem:[%s2 + $0x8] sm:$0xff]
    %v29 = vld [vmem:[%s2 + $0x10] sm:$0xff]
    %v30 = vld [vmem:[%s2 + $0x18] sm:$0xff]
    %v31 = vld [vmem:[%s3] sm:$0x1]
    %v33 = vlaneseq
    %v34 = vshrl.u32 %v33, 7
    %v35 = vsub.s32 0, %v34
    %v36 = vrot.slane %v31, %v35
    %vm38 = vcmask 261120
    %v40 = vsel %vm38, %v26, 0
    %42 = vmatprep.subr.mxu0 0.0
    %43 = vmatpush1.msra.mxu0 %v27
    %44 = vmatprep.subr.mxu0 0.0
    %45 = vmatpush1.msra.mxu0 %v28
    %46 = vmatprep.subr.mxu0 0.0
    %47 = vmatpush1.msra.mxu0 %v29
    %48 = vmatprep.subr.mxu0 0.0
    %49 = vmatpush1.msra.mxu0 %v30
    %50 = vmatprep.subr.mxu0 0.0
    %51 = vmatpush1.msra.mxu0 0.0
    %52 = vmatprep.subr.mxu0 0.0
    %53 = vmatpush1.msra.mxu0 0.0
    %54 = vmatprep.subr.mxu0 0.0
    %55 = vmatpush1.msra.mxu0 0.0
    %56 = vmatprep.subr.mxu0 0.0
    %57 = vmatpush1.msra.mxu0 0.0
    %58 = vmatprep.subr.mxu0 0.0
    %59 = vmatpush1.msra.mxu0 0.0
    %60 = vmatprep.subr.mxu0 0.0
    %61 = vmatpush1.msra.mxu0 0.0
    %62 = vmatprep.subr.mxu0 0.0
    %63 = vmatpush1.msra.mxu0 0.0
    %64 = vmatprep.subr.mxu0 0.0
    %65 = vmatpush1.msra.mxu0 0.0
    %66 = vmatprep.subr.mxu0 0.0
    %67 = vmatpush1.msra.mxu0 0.0
    %68 = vmatprep.subr.mxu0 0.0
    %69 = vmatpush1.msra.mxu0 0.0
    %70 = vmatprep.subr.mxu0 0.0
    %71 = vmatpush1.msra.mxu0 0.0
    %72 = vmatprep.subr.mxu0 0.0
    %73 = vmatpush1.msra.mxu0 0.0
    %74 = vmatprep.subr.mxu0 0.0
    %75 = vmatpush1.msra.mxu0 0.0
    %76 = vmatprep.subr.mxu0 0.0
    %77 = vmatpush1.msra.mxu0 0.0
    %78 = vmatprep.subr.mxu0 0.0
    %79 = vmatpush1.msra.mxu0 0.0
    %80 = vmatprep.subr.mxu0 0.0
    %81 = vmatpush1.msra.mxu0 0.0
    %82 = vmatprep.subr.mxu0 0.0
    %83 = vmatpush1.msra.mxu0 0.0
    %84 = vmatprep.subr.mxu0 0.0
    %85 = vmatpush1.msra.mxu0 0.0
    %86 = vmatprep.subr.mxu0 0.0
    %87 = vmatpush1.msra.mxu0 0.0
    %88 = vmatprep.subr.mxu0 0.0
    %89 = vmatpush1.msra.mxu0 0.0
    %90 = vmatprep.subr.mxu0 0.0
    %91 = vmatpush1.msra.mxu0 0.0
    %92 = vmatprep.subr.mxu0 0.0
    %93 = vmatpush1.msra.mxu0 0.0
    %94 = vmatprep.subr.mxu0 0.0
    %95 = vmatpush1.msra.mxu0 0.0
    %96 = vmatprep.subr.mxu0 0.0
    %97 = vmatpush1.msra.mxu0 0.0
    %98 = vmatprep.subr.mxu0 0.0
    %99 = vmatpush1.msra.mxu0 0.0
    %100 = vmatprep.subr.mxu0 0.0
    %101 = vmatpush1.msra.mxu0 0.0
    %102 = vmatprep.subr.mxu0 0.0
    %103 = vmatpush1.msra.mxu0 0.0
    %104 = vmatprep.subr.mxu0 0.0
    %105 = vmatpush1.msra.mxu0 0.0
    %106 = vmatprep.mubr.f32.mxu0 0.0
    %107 = vmatmul.mubr.f32.gmra.mrb[0].mxu0 %v40
    %v108 = vpop.f32.mrb[0].mxu0
    %v109 = vadd.f32 %v36, %v108
    %v110 = vpop.f32.mrb[0].mxu0
    %111 = vdwg.mxu0
    %vm112 = vcmask 64512
    %113 = vst.msk [vmem:[#allocation2] sm:$0xff] %vm112, %v109
    // Predicated region
    $region18: #{tpu_custom_call.1} parent=1 // pred_check
      _
    $region19: #{tpu_custom_call.1} parent=1 // pred_check_branch
      %115 = sbr.rel (0) target = $region21
    $region20: #{tpu_custom_call.1} parent=1 // pred_region
      %s117 = ssub.s32 128, 128
      %118 = vsyncadd [#allocation3], %s117
      %s120 = sshll.u32 [#allocation2], 4
      %s121 = int_to_ptr.vmem [resolvable:$true] %s120
      %123 = dma.vmem_to_hbm [thread:$0]  %s121, 128, %s4, [#allocation3]
    $region21: #{tpu_custom_call.1} parent=1 // pred_fallthru
      _
    // Predicated region
    $region22: #{tpu_custom_call.1} parent=1 // pred_check
      _
    $region23: #{tpu_custom_call.1} parent=1 // pred_check_branch
      %125 = sbr.rel (0) target = $region25
    $region24: #{tpu_custom_call.1} parent=1 // pred_region
      %126 = dma.done [#allocation3], 128
    $region25: #{tpu_custom_call.1} parent=1 // pred_fallthru
      _
    %127 = vsyncpa [#allocation3], 1

</llo_original>
